<compile_context>
chip_gen: v5e
topology: v5e:2x2
jax: 0.10.0
libtpu: 0.0.40
codegen_flags: <defaults>
</compile_context>

<pallas_src>
import functools

import jax
import jax.numpy as jnp
from jax import lax
from jax.experimental import pallas as pl
from jax.experimental.pallas import tpu as pltpu


def _focal_loss_kernel(logp_ref, tgt_ref, out_ref, acc_ref, *, gamma, F, P):
    # grid = (frame_blocks [parallel], pixel_tiles [arbitrary / reduction])
    f = pl.program_id(0)
    k = pl.program_id(1)
    fb, C, tp = logp_ref.shape

    @pl.when(k == 0)
    def _():
        acc_ref[...] = jnp.zeros_like(acc_ref)

    logp = logp_ref[...]                     # (fb, C, tp), input dtype (f32/bf16)
    tgt = tgt_ref[...]                       # (fb, tp) int32

    # Per-pixel gather of the target-class log-prob: tiny (1, C, tp) iota,
    # select + sublane reduce over C, all in the input dtype (exact: only one
    # nonzero term survives the reduce).
    cls = lax.broadcasted_iota(jnp.int32, (1, C, tp), 1)
    hit = cls == tgt[:, None, :]             # (fb, C, tp) bool (broadcast)
    logpt = jnp.sum(jnp.where(hit, logp, 0.0), axis=1)   # (fb, tp), input dtype

    # Ragged-tail masks (replace host-side padding). Only emitted when the
    # true extents are not multiples of the block sizes; masking logpt to 0
    # makes the contribution exactly zero (pt = 1) and discards any stale
    # out-of-bounds VMEM data (select does not propagate NaN/Inf).
    if P % tp != 0:
        lane = lax.broadcasted_iota(jnp.int32, (fb, tp), 1)
        logpt = jnp.where(k * tp + lane < P, logpt, 0.0)
    if F % fb != 0:
        row = lax.broadcasted_iota(jnp.int32, (fb, tp), 0)
        logpt = jnp.where(f * fb + row < F, logpt, 0.0)

    # Upcast only the (fb, tp) result, not the (fb, C, tp) block.
    logpt = logpt.astype(jnp.float32)
    pt = jnp.exp(logpt)
    acc_ref[...] += -((1.0 - pt) ** gamma) * logpt       # deferred reduction

    @pl.when(k == pl.num_programs(1) - 1)
    def _():
        s = jnp.sum(acc_ref[...], axis=1, keepdims=True)  # lanes    -> (fb, 1)
        s = jnp.sum(s, axis=0, keepdims=True)             # sublanes -> (1, 1)
        out_ref[...] = s.reshape(1, 1, 1)


def _choose_tiles(F, P, C, itemsize, *, pixel_tile, target_block_bytes,
                  vmem_limit_bytes):
    # Pixel tile: lane-dense multiple of 128, or the full P (also legal).
    tp = min(int(pixel_tile), pl.cdiv(P, 128) * 128)
    if tp >= P:
        tp = P

    # Frame block: dtype-aware, ~target_block_bytes of HBM data per step.
    fb = max(1, target_block_bytes // max(1, C * tp * itemsize))
    if F >= 16:
        fb = min(fb, F // 2)          # >= 2 frame blocks: both v7x TensorCores
        fb = max(8, (fb // 8) * 8)    # sublane rule for the 2-D target block
    else:
        fb = F                        # single frame block (fb == full dim)

    def footprint(fb_, tp_):
        logp_blk = fb_ * C * tp_ * itemsize
        tgt_blk = fb_ * tp_ * 4
        acc = fb_ * tp_ * 4
        temps = 2 * fb_ * C * tp_ * 4   # conservative f32-equivalent bound
        return 2 * (logp_blk + tgt_blk) + acc + temps

    # Shrink until the estimate (plus margin) fits the explicit VMEM budget.
    while footprint(fb, tp) + (4 << 20) > vmem_limit_bytes:
        if fb > 8 and fb % 8 == 0:
            fb = max(8, ((fb // 2) // 8) * 8)
        elif tp > 256 and tp % 256 == 0:
            tp //= 2
        else:
            break
    return fb, tp


def focal_loss(out_seg, gt_seg, gamma=6, *, pixel_tile=2048,
               target_block_bytes=6 << 20, vmem_limit_bytes=40 << 20):
    """out_seg: (B, T, C, H, W, 1) log-probs; gt_seg: (B, T, H, W) int labels.

    Returns the scalar focal loss (mean over all B*T*H*W pixels).
    """
    out_seg = jnp.squeeze(out_seg, axis=5)          # (B, T, C, H, W)
    B, T, C, H, W = out_seg.shape
    assert gt_seg.shape == (B, T, H, W), (gt_seg.shape, (B, T, H, W))

    F = B * T
    P = H * W
    n_elems = F * P

    logp = out_seg.reshape(F, C, P)                 # transpose-free reshape
    tgt = gt_seg.reshape(F, P).astype(jnp.int32)    # 2-D, (8,128)-dense layout

    itemsize = jnp.dtype(logp.dtype).itemsize
    fb, tp = _choose_tiles(F, P, C, itemsize, pixel_tile=pixel_tile,
                           target_block_bytes=target_block_bytes,
                           vmem_limit_bytes=vmem_limit_bytes)

    n_fb = pl.cdiv(F, fb)
    n_pt = pl.cdiv(P, tp)

    kernel = functools.partial(_focal_loss_kernel, gamma=gamma, F=F, P=P)

    partial_sums = pl.pallas_call(
        kernel,
        out_shape=jax.ShapeDtypeStruct((n_fb, 1, 1), jnp.float32),
        grid_spec=pltpu.PrefetchScalarGridSpec(
            num_scalar_prefetch=0,
            grid=(n_fb, n_pt),
            in_specs=[
                pl.BlockSpec((fb, C, tp), lambda f, k: (f, 0, k)),
                pl.BlockSpec((fb, tp), lambda f, k: (f, k)),
            ],
            out_specs=pl.BlockSpec((1, 1, 1), lambda f, k: (f, 0, 0)),
            scratch_shapes=[pltpu.VMEM((fb, tp), jnp.float32)],
        ),
        compiler_params=pltpu.CompilerParams(
            # frame-block axis shards across v7x's two TensorCores; the
            # pixel-tile axis is the resident-accumulator reduction axis.
            dimension_semantics=("parallel", "arbitrary"),
            vmem_limit_bytes=vmem_limit_bytes,
        ),
    )(logp, tgt)

    return jnp.sum(partial_sums) / n_elems


def focal_loss_forward(model_outputs, batch, gamma=6):
    """Mirrors FocalLoss.forward input plumbing."""
    _, _, segmentations, _, _, _, _ = batch
    if isinstance(model_outputs, dict):
        out_seg = model_outputs['outputs']['log_alpha_mask']
    else:
        out_seg = model_outputs[3]
    return focal_loss(out_seg, segmentations, gamma=gamma)


def focal_loss_ref(out_seg, gt_seg, gamma=6):
    x = jnp.squeeze(out_seg, axis=5).astype(jnp.float32)   # (B, T, C, H, W)
    B, T, C, H, W = x.shape
    inp = x.reshape(B * T, C, H * W).transpose(0, 2, 1).reshape(-1, C)
    tgt = gt_seg.reshape(-1).astype(jnp.int32)
    logpt = jnp.take_along_axis(inp, tgt[:, None], axis=1)[:, 0]
    pt = jnp.exp(logpt)
    loss = -((1.0 - pt) ** gamma) * logpt
    return loss.mean()


if __name__ == "__main__":
    # Shapes consistent with the module: log_alpha_mask (B, T, C, H, W, 1)
    # log-probs, segmentations (B, T, H, W) integer labels in [0, C).
    # F = B*T = 16 gives two parallel frame blocks (fb = 8).
    B, T, C, H, W = 2, 8, 8, 16, 16
    key = jax.random.PRNGKey(0)
    k1, k2 = jax.random.split(key)

    raw = jax.random.normal(k1, (B, T, C, H, W, 1), dtype=jnp.float32)
    log_alpha_mask = jax.nn.log_softmax(raw, axis=2)
    segmentations = jax.random.randint(k2, (B, T, H, W), 0, C, dtype=jnp.int32)

    model_outputs = (None, None, None, log_alpha_mask)
    batch = (None, None, segmentations, None, None, None, None)

    loss = focal_loss_forward(model_outputs, batch, gamma=6)
    loss = jax.block_until_ready(loss)

    ref = focal_loss_ref(log_alpha_mask, segmentations, gamma=6)
    assert loss.shape == (), loss.shape
    assert jnp.allclose(loss, ref, rtol=1e-5, atol=1e-6), (loss, ref)

    # Ragged-shape check: exercises the in-kernel tail masks (no host padding).
    # F = 20 with fb = 8 -> ragged frame block; P = 135 with tp = 128 -> ragged
    # pixel tile.
    B2, T2, C2, H2, W2 = 4, 5, 6, 9, 15
    k3, k4 = jax.random.split(k2)
    raw2 = jax.random.normal(k3, (B2, T2, C2, H2, W2, 1), dtype=jnp.float32)
    lam2 = jax.nn.log_softmax(raw2, axis=2)
    seg2 = jax.random.randint(k4, (B2, T2, H2, W2), 0, C2, dtype=jnp.int32)

    loss2 = focal_loss(lam2, seg2, gamma=6, pixel_tile=128)
    loss2 = jax.block_until_ready(loss2)
    ref2 = focal_loss_ref(lam2, seg2, gamma=6)
    assert jnp.allclose(loss2, ref2, rtol=1e-5, atol=1e-6), (loss2, ref2)

    print("KERNEL_OK")
</pallas_src>

<mosaic_0001>
module attributes {stable_mosaic.version = 11 : i64} {
  func.func @_focal_loss_kernel(%arg0: i32, %arg1: i32, %arg2: memref<8x8x256xf32, #tpu.memory_space<vmem>>, %arg3: memref<8x256xi32, #tpu.memory_space<vmem>>, %arg4: memref<1x1x1xf32, #tpu.memory_space<vmem>>, %arg5: memref<8x256xf32, #tpu.memory_space<vmem>>) attributes {dimension_semantics = [#tpu.dimension_semantics<parallel>, #tpu.dimension_semantics<arbitrary>], iteration_bounds = array<i64: 2, 1>, scalar_prefetch = 0 : i64, scratch_operands = 1 : i64, tpu.core_type = #tpu.core_type<tc>, window_params = [{transform_indices = @transform_0, window_bounds = array<i64: 8, 8, 256>}, {transform_indices = @transform_1, window_bounds = array<i64: 8, 256>}, {transform_indices = @transform_2, window_bounds = array<i64: 1, 1, 1>}]} {
    %c0_i32 = arith.constant 0 : i32
    %0 = arith.cmpi eq, %arg1, %c0_i32 : i32
    %1 = arith.extui %0 : i1 to i32
    %c0_i32_0 = arith.constant 0 : i32
    %2 = arith.cmpi ne, %1, %c0_i32_0 : i32
    scf.if %2 {
      %cst_14 = arith.constant 0.000000e+00 : f32
      %28 = vector.broadcast %cst_14 : f32 to vector<8x256xf32>
      %c0_15 = arith.constant 0 : index
      %c0_16 = arith.constant 0 : index
      %29 = vector.load %arg5[%c0_15, %c0_16] : memref<8x256xf32, #tpu.memory_space<vmem>>, vector<8x256xf32>
      tpu.vector_store %arg5[%c0_15, %c0_16], %28 {strides = array<i32>} : memref<8x256xf32, #tpu.memory_space<vmem>>, vector<8x256xf32>,
    } else {
    }
    %c0 = arith.constant 0 : index
    %c0_1 = arith.constant 0 : index
    %c0_2 = arith.constant 0 : index
    %3 = vector.load %arg2[%c0, %c0_1, %c0_2] : memref<8x8x256xf32, #tpu.memory_space<vmem>>, vector<8x8x256xf32>
    %c0_3 = arith.constant 0 : index
    %c0_4 = arith.constant 0 : index
    %4 = vector.load %arg3[%c0_3, %c0_4] : memref<8x256xi32, #tpu.memory_space<vmem>>, vector<8x256xi32>
    %5 = tpu.iota {dimensions = array<i32: 1>} : vector<1x8x256xi32>
    %6 = vector.shape_cast %4 : vector<8x256xi32> to vector<8x1x256xi32>
    %7 = vector.broadcast %5 : vector<1x8x256xi32> to vector<8x8x256xi32>
    %8 = vector.broadcast %6 : vector<8x1x256xi32> to vector<8x8x256xi32>
    %9 = arith.cmpi eq, %7, %8 : vector<8x8x256xi32>
    %cst = arith.constant 0.000000e+00 : f32
    %10 = vector.broadcast %cst : f32 to vector<8x8x256xf32>
    %11 = arith.select %9, %3, %10 : vector<8x8x256xi1>, vector<8x8x256xf32>
    %cst_5 = arith.constant dense<0.000000e+00> : vector<8x256xf32>
    %12 = vector.multi_reduction <add>, %11, %cst_5 [1] : vector<8x8x256xf32> to vector<8x256xf32>
    %13 = math.exp %12 : vector<8x256xf32>
    %c0_6 = arith.constant 0 : index
    %c0_7 = arith.constant 0 : index
    %14 = vector.load %arg5[%c0_6, %c0_7] : memref<8x256xf32, #tpu.memory_space<vmem>>, vector<8x256xf32>
    %cst_8 = arith.constant 1.000000e+00 : f32
    %15 = vector.broadcast %cst_8 : f32 to vector<8x256xf32>
    %16 = arith.subf %15, %13 : vector<8x256xf32>
    %17 = arith.mulf %16, %16 : vector<8x256xf32>
    %18 = arith.mulf %17, %17 : vector<8x256xf32>
    %19 = arith.mulf %17, %18 : vector<8x256xf32>
    %cst_9 = arith.constant 0.000000e+00 : f32
    %20 = vector.broadcast %cst_9 : f32 to vector<8x256xf32>
    %21 = arith.subf %20, %19 : vector<8x256xf32>
    %22 = arith.mulf %21, %12 : vector<8x256xf32>
    %23 = arith.addf %14, %22 : vector<8x256xf32>
    %c0_10 = arith.constant 0 : index
    %c0_11 = arith.constant 0 : index
    %24 = vector.load %arg5[%c0_10, %c0_11] : memref<8x256xf32, #tpu.memory_space<vmem>>, vector<8x256xf32>
    tpu.vector_store %arg5[%c0_10, %c0_11], %23 {strides = array<i32>} : memref<8x256xf32, #tpu.memory_space<vmem>>, vector<8x256xf32>,
    %c0_i32_12 = arith.constant 0 : i32
    %25 = arith.cmpi eq, %arg1, %c0_i32_12 : i32
    %26 = arith.extui %25 : i1 to i32
    %c0_i32_13 = arith.constant 0 : i32
    %27 = arith.cmpi ne, %26, %c0_i32_13 : i32
    scf.if %27 {
      %c0_14 = arith.constant 0 : index
      %c0_15 = arith.constant 0 : index
      %28 = vector.load %arg5[%c0_14, %c0_15] : memref<8x256xf32, #tpu.memory_space<vmem>>, vector<8x256xf32>
      %cst_16 = arith.constant dense<0.000000e+00> : vector<8xf32>
      %29 = vector.multi_reduction <add>, %28, %cst_16 [1] : vector<8x256xf32> to vector<8xf32>
      %30 = vector.shape_cast %29 : vector<8xf32> to vector<8x1xf32>
      %cst_17 = arith.constant dense<0.000000e+00> : vector<1xf32>
      %31 = vector.multi_reduction <add>, %30, %cst_17 [0] : vector<8x1xf32> to vector<1xf32>
      %32 = vector.shape_cast %31 : vector<1xf32> to vector<1x1xf32>
      %33 = vector.shape_cast %32 : vector<1x1xf32> to vector<1x1x1xf32>
      %c0_18 = arith.constant 0 : index
      %c0_19 = arith.constant 0 : index
      %c0_20 = arith.constant 0 : index
      %34 = vector.load %arg4[%c0_18, %c0_19, %c0_20] : memref<1x1x1xf32, #tpu.memory_space<vmem>>, vector<1x1x1xf32>
      tpu.vector_store %arg4[%c0_18, %c0_19, %c0_20], %33 {strides = array<i32>} : memref<1x1x1xf32, #tpu.memory_space<vmem>>, vector<1x1x1xf32>,
    } else {
    }
    return
  }
  func.func @transform_0(%arg0: i32, %arg1: i32) -> (i32, i32, i32) {
    %c0_i32 = arith.constant 0 : i32
    %c0_i32_0 = arith.constant 0 : i32
    return %arg0, %c0_i32, %arg1 : i32, i32, i32
  }
  func.func @transform_1(%arg0: i32, %arg1: i32) -> (i32, i32) {
    %c0_i32 = arith.constant 0 : i32
    return %arg0, %arg1 : i32, i32
  }
  func.func @transform_2(%arg0: i32, %arg1: i32) -> (i32, i32, i32) {
    %c0_i32 = arith.constant 0 : i32
    %c0_i32_0 = arith.constant 0 : i32
    %c0_i32_1 = arith.constant 0 : i32
    return %arg0, %c0_i32, %c0_i32_0 : i32, i32, i32
  }
}

</mosaic_0001>

<llo_original>
// kernel: tpu_custom_call.1
$region0: #{tpu_custom_call.1}
  #allocation0 [shape = 'u32[]', space=smem, size = 0x4, offset = 0x4, fixed_abs, tag = 'smem constant byte address 0x4 - core index']
  #allocation1 [shape = 'u32[72,128]{1,0:T(1,128)}', space=vmem, size = 0x9000, scoped, tag = 'internal scratch']
  #allocation2 [shape = 'f32[8,256]{1,0:T(8,128)}', space=vmem, size = 0x2000, scoped, tag = 'scratch operand']
  %s0 = inlined_call_operand.hbm [shape: f32[16,8,256], index: 0, kind: input, shape index: {}]
  %s1 = inlined_call_operand.hbm [shape: s32[16,256], index: 1, kind: input, shape index: {}]
  %s2 = inlined_call_operand.vmem [shape: f32[2,1,1], index: 2, kind: output, shape index: {}]
  %s3 = sld [smem:[#allocation0]]
  $region57: #{tpu_custom_call.1} parent=0
    _
  %s5 = ssub.s32 1, %s3
  %s6 = scalar_select 0, %s5, %s3
  $region1: #{tpu_custom_call.1} parent=0
    #allocation3 [shape = 'u8[131072]{0}', space=vmem, size = 0x20000, scoped, tag = 'input window, operand 0']
    #allocation4 [shape = 's32[2]{0}', space=sflag, size = 0x8, scoped, tag = 'scoped memory for tpu_custom_call.1']
    #allocation5 [shape = 'u8[16384]{0}', space=vmem, size = 0x4000, scoped, tag = 'input window, operand 1']
    #allocation6 [shape = 's32[2]{0}', space=sflag, size = 0x8, scoped, tag = 'scoped memory for tpu_custom_call.1']
    %7 = vsyncpa [#allocation4], 0
    %s8 = scalar_lea.sflag [#allocation4], 1
    %9 = vsyncpa %s8, 0
    %10 = vsyncpa [#allocation6], 0
    %s11 = scalar_lea.sflag [#allocation6], 1
    %12 = vsyncpa %s11, 0
    loop: start=0, step=1, limit=4
    $region2: #{tpu_custom_call.1} parent=1 // loop_pre_header
      _
    $region3: #{tpu_custom_call.1} parent=1 // loop_header
      %s14 = sphi 0, %s18
      %p15 = scmp.ge.s32.totalorder %s14, 4
      %s21 = sphi 0, %s33
      %s22 = sphi 0, %s29
      %s23 = sphi 0, %s21
      %s24 = sphi 0, %s22
      %s25 = sphi 0, %s23
      %s26 = sphi 0, %s24
      %s38 = sphi 0, %s40
      %s41 = sphi 0, %s38
      %s42 = sphi 0, %s41
      %s58 = sphi 0, %s42
      %s66 = sphi 0, %s68
      %s69 = sphi 0, %s66
      %s70 = sphi 0, %s69
      %s86 = sphi 0, %s70
      %s92 = sphi 0, %s94
      %s95 = sphi 0, %s92
      %s96 = sphi 0, %s95
      %s112 = sphi 0, %s96
    $region4: #{tpu_custom_call.1} parent=1 // loop_header_branch
      %17 = sbr.rel (%p15) target = $region8
    $region5: #{tpu_custom_call.1} parent=1 // loop_body
      %s19 = ssub.s32 %s14, 1
      %s20 = ssub.s32 %s14, 2
      %s27 = sadd.s32 1, %s22
      %p28 = scmp.ge.s32.totalorder %s27, 1
      %s29 = scalar_select %p28, 0, %s27
      %s30 = sadd.s32 1, %s21
      %s31 = scalar_select %p28, %s30, %s21
      %p32 = scmp.ge.s32.totalorder %s31, 2
      %s33 = scalar_select %p32, 0, %s31
      %s34 = ssub.s32 %s21, %s33
      %s35 = ssub.s32 %s22, %s29
      %s36 = sor.u32 %s34, %s35
      %p37 = scmp.eq.s32.totalorder %s36, 0
      %s39 = sadd.s32 %s38, 1
      %s40 = scalar_select %p37, %s38, %s39
      %p43 = pneg %p37
      %p44 = scmp.eq.s32.totalorder %s14, 1
      %p45 = por %p43, %p44
      %p46 = scmp.ne.s32.totalorder %s38, %s41
      %p47 = scmp.eq.s32.totalorder %s14, 0
      %p48 = por %p46, %p47
      %p49 = scmp.ne.s32.totalorder %s38, %s41
      %p50 = scmp.eq.s32.totalorder %s19, 1
      %p51 = por %p49, %p50
      %p52 = scmp.ne.s32.totalorder %s41, %s42
      %p53 = scmp.eq.s32.totalorder %s19, 0
      %p54 = por %p52, %p53
      %p55 = scmp.ne.s32.totalorder %s41, %s42
      %p56 = scmp.eq.s32.totalorder %s20, 1
      %p57 = por %p55, %p56
      %p59 = scmp.ne.s32.totalorder %s42, %s58
      %p60 = scmp.eq.s32.totalorder %s20, 0
      %p61 = por %p59, %p60
      %s62 = ssub.s32 %s21, %s33
      %s63 = ssub.s32 %s22, %s29
      %s64 = sor.u32 %s62, %s63
      %p65 = scmp.eq.s32.totalorder %s64, 0
      %s67 = sadd.s32 %s66, 1
      %s68 = scalar_select %p65, %s66, %s67
      %p71 = pneg %p65
      %p72 = scmp.eq.s32.totalorder %s14, 1
      %p73 = por %p71, %p72
      %p74 = scmp.ne.s32.totalorder %s66, %s69
      %p75 = scmp.eq.s32.totalorder %s14, 0
      %p76 = por %p74, %p75
      %p77 = scmp.ne.s32.totalorder %s66, %s69
      %p78 = scmp.eq.s32.totalorder %s19, 1
      %p79 = por %p77, %p78
      %p80 = scmp.ne.s32.totalorder %s69, %s70
      %p81 = scmp.eq.s32.totalorder %s19, 0
      %p82 = por %p80, %p81
      %p83 = scmp.ne.s32.totalorder %s69, %s70
      %p84 = scmp.eq.s32.totalorder %s20, 1
      %p85 = por %p83, %p84
      %p87 = scmp.ne.s32.totalorder %s70, %s86
      %p88 = scmp.eq.s32.totalorder %s20, 0
      %p89 = por %p87, %p88
      %s90 = ssub.s32 %s21, %s33
      %p91 = scmp.eq.s32.totalorder %s90, 0
      %s93 = sadd.s32 %s92, 1
      %s94 = scalar_select %p91, %s92, %s93
      %p97 = pneg %p91
      %p98 = scmp.eq.s32.totalorder %s14, 1
      %p99 = por %p97, %p98
      %p100 = scmp.ne.s32.totalorder %s92, %s95
      %p101 = scmp.eq.s32.totalorder %s14, 0
      %p102 = por %p100, %p101
      %p103 = scmp.ne.s32.totalorder %s92, %s95
      %p104 = scmp.eq.s32.totalorder %s19, 1
      %p105 = por %p103, %p104
      %p106 = scmp.ne.s32.totalorder %s95, %s96
      %p107 = scmp.eq.s32.totalorder %s19, 0
      %p108 = por %p106, %p107
      %p109 = scmp.ne.s32.totalorder %s95, %s96
      %p110 = scmp.eq.s32.totalorder %s20, 1
      %p111 = por %p109, %p110
      %p113 = scmp.ne.s32.totalorder %s96, %s112
      %p114 = scmp.eq.s32.totalorder %s20, 0
      %p115 = por %p113, %p114
      %p116 = scmp.le.s32.totalorder 1, %s14
      %p117 = scmp.lt.s32.totalorder %s14, 3
      %p118 = pnand %p116, %p117
      %p119 = pneg %p118
      // Predicated region
      $region9: #{tpu_custom_call.1} parent=5 // pred_check
        _
      $region10: #{tpu_custom_call.1} parent=5 // pred_check_branch
        %121 = sbr.rel (%p118) target = $region12
      $region11: #{tpu_custom_call.1} parent=5 // pred_region
        %s122 = ssub.s32 %s14, 1
      $region12: #{tpu_custom_call.1} parent=5 // pred_fallthru
        _
      %p123 = scmp.lt.s32.totalorder %s14, 2
      // Predicated region
      $region13: #{tpu_custom_call.1} parent=5 // pred_check
        %p124 = pneg %p123
      $region14: #{tpu_custom_call.1} parent=5 // pred_check_branch
        %126 = sbr.rel (%p124) target = $region16
      $region15: #{tpu_custom_call.1} parent=5 // pred_region
        // Predicated region
        $region17: #{tpu_custom_call.1} parent=15 // pred_check
          %p127 = pneg %p48
        $region18: #{tpu_custom_call.1} parent=15 // pred_check_branch
          %129 = sbr.rel (%p127) target = $region20
        $region19: #{tpu_custom_call.1} parent=15 // pred_region
          %s130 = sand.u32 %s38, 1
          %s131 = scalar_lea.sflag [#allocation4], %s130
          %s132 = sand.u32 %s38, 1
          %s133 = smul.addr %s132, 128
          %s134 = scalar_lea.vmem [#allocation3], %s133
          %s135 = smul.u32 8, %s21
          %s136 = smul.u32 2, %s22
          %138 = vsyncadd %s131, 0
          %s139 = smul.addr %s135, 2
          %s140 = sadd.s32 %s136, %s139
          %s141 = smul.addr %s140, 8
          %s142 = scalar_lea.hbm %s0, %s141
          %s143 = sshll.u32 %s142, 4
          %s144 = int_to_ptr.hbm [resolvable:$true] %s143
          %s145 = sshll.u32 %s134, 4
          %s146 = int_to_ptr.vmem [resolvable:$true] %s145
          %151 = dma.hbm_to_vmem [thread:$0]  %s144, 2048, %s146, %s131, 256, 256, 16
        $region20: #{tpu_custom_call.1} parent=15 // pred_fallthru
          _
        // Predicated region
        $region21: #{tpu_custom_call.1} parent=15 // pred_check
          %p152 = pneg %p76
        $region22: #{tpu_custom_call.1} parent=15 // pred_check_branch
          %154 = sbr.rel (%p152) target = $region24
        $region23: #{tpu_custom_call.1} parent=15 // pred_region
          %s155 = sand.u32 %s66, 1
          %s156 = scalar_lea.sflag [#allocation6], %s155
          %s157 = sand.u32 %s66, 1
          %s158 = smul.addr %s157, 16
          %s159 = scalar_lea.vmem [#allocation5], %s158
          %s160 = smul.u32 2, %s22
          %162 = vsyncadd %s156, 0
          %s163 = smul.addr %s21, 2
          %s164 = sadd.s32 %s160, %s163
          %s165 = smul.addr %s164, 8
          %s166 = scalar_lea.hbm %s1, %s165
          %s168 = sshll.u32 %s166, 4
          %s169 = int_to_ptr.hbm [resolvable:$true] %s168
          %s170 = sshll.u32 %s159, 4
          %s171 = int_to_ptr.vmem [resolvable:$true] %s170
          %173 = dma.hbm_to_vmem [thread:$0]  %s169, 256, %s171, %s156
        $region24: #{tpu_custom_call.1} parent=15 // pred_fallthru
          _
      $region16: #{tpu_custom_call.1} parent=5 // pred_fallthru
        _
      %p174 = scmp.le.s32.totalorder 1, %s14
      %p175 = scmp.lt.s32.totalorder %s14, 3
      %p176 = pnand %p174, %p175
      %p177 = pneg %p176
      // Predicated region
      $region25: #{tpu_custom_call.1} parent=5 // pred_check
        _
      $region26: #{tpu_custom_call.1} parent=5 // pred_check_branch
        %179 = sbr.rel (%p176) target = $region28
      $region27: #{tpu_custom_call.1} parent=5 // pred_region
        %s180 = ssub.s32 %s14, 1
        %s181 = sand.u32 %s41, 1
        %s182 = scalar_lea.sflag [#allocation4], %s181
        %s183 = sand.u32 %s41, 1
        %s184 = smul.addr %s183, 128
        %s185 = scalar_lea.vmem [#allocation3], %s184
        // Predicated region
        $region29: #{tpu_custom_call.1} parent=27 // pred_check
          %p186 = pneg %p54
        $region30: #{tpu_custom_call.1} parent=27 // pred_check_branch
          %188 = sbr.rel (%p186) target = $region32
        $region31: #{tpu_custom_call.1} parent=27 // pred_region
          %190 = dma.done %s182, 2048
        $region32: #{tpu_custom_call.1} parent=27 // pred_fallthru
          _
        %s191 = sand.u32 %s69, 1
        %s192 = scalar_lea.sflag [#allocation6], %s191
        %s193 = sand.u32 %s69, 1
        %s194 = smul.addr %s193, 16
        %s195 = scalar_lea.vmem [#allocation5], %s194
        // Predicated region
        $region33: #{tpu_custom_call.1} parent=27 // pred_check
          %p196 = pneg %p82
        $region34: #{tpu_custom_call.1} parent=27 // pred_check_branch
          %198 = sbr.rel (%p196) target = $region36
        $region35: #{tpu_custom_call.1} parent=27 // pred_region
          %200 = dma.done %s192, 256
        $region36: #{tpu_custom_call.1} parent=27 // pred_fallthru
          _
        %s201 = sand.u32 %s41, 1
        %s202 = scalar_lea.sflag [#allocation4], %s201
        %s203 = sand.u32 %s41, 1
        %s204 = smul.addr %s203, 128
        %s205 = scalar_lea.vmem [#allocation3], %s204
        %p206 = pneg %p54
        %p207 = pneg %p51
        %s208 = sand.u32 %s69, 1
        %s209 = scalar_lea.sflag [#allocation6], %s208
        %s210 = sand.u32 %s69, 1
        %s211 = smul.addr %s210, 16
        %s212 = scalar_lea.vmem [#allocation5], %s211
        %p213 = pneg %p82
        %p214 = pneg %p79
        %p215 = pneg %p108
        %p216 = pneg %p105
        %p217 = scmp.lt.s32.totalorder %s23, 1
        %s218 = scalar_select %p217, %s23, 1
        %s219 = scalar_lea.vmem %s2, %s218
        %s220 = smul.u32 8, %s23
        %s221 = smul.u32 2, %s24
        %s222 = smul.u32 2, %s24
        %p223 = scmp.lt.s32.totalorder %s23, 1
        %s224 = scalar_select %p223, %s23, 1
        %s225 = scalar_lea.vmem %s2, %s224
        %p226 = scmp.eq.s32.totalorder %s24, 0
        // Predicated region
        $region37: #{tpu_custom_call.1} parent=27 // pred_check
          %p227 = pneg %p226
        $region38: #{tpu_custom_call.1} parent=27 // pred_check_branch
          %229 = sbr.rel (%p227) target = $region40
        $region39: #{tpu_custom_call.1} parent=27 // pred_region
          %230 = vst [vmem:[#allocation2] sm:$0xff] 0.0
          %231 = vst [vmem:[#allocation2 + $0x8] sm:$0xff] 0.0
        $region40: #{tpu_custom_call.1} parent=27 // pred_fallthru
          _
        %v232 = vld [vmem:[%s185] sm:$0xff]
        %v233 = vld [vmem:[%s185 + $0x8] sm:$0xff]
        %v234 = vld [vmem:[%s185 + $0x10] sm:$0xff]
        %v235 = vld [vmem:[%s185 + $0x18] sm:$0xff]
        %v236 = vld [vmem:[%s185 + $0x20] sm:$0xff]
        %v237 = vld [vmem:[%s185 + $0x28] sm:$0xff]
        %v238 = vld [vmem:[%s185 + $0x30] sm:$0xff]
        %v239 = vld [vmem:[%s185 + $0x38] sm:$0xff]
        %v240 = vld [vmem:[%s185 + $0x40] sm:$0xff]
        %v241 = vld [vmem:[%s185 + $0x48] sm:$0xff]
        %v242 = vld [vmem:[%s185 + $0x50] sm:$0xff]
        %v243 = vld [vmem:[%s185 + $0x58] sm:$0xff]
        %v244 = vld [vmem:[%s185 + $0x60] sm:$0xff]
        %v245 = vld [vmem:[%s185 + $0x68] sm:$0xff]
        %v246 = vld [vmem:[%s185 + $0x70] sm:$0xff]
        %v247 = vld [vmem:[%s185 + $0x78] sm:$0xff]
        %v248 = vld [vmem:[%s195] sm:$0xff]
        %v249 = vld [vmem:[%s195 + $0x8] sm:$0xff]
        %v250 = vlaneseq
        %v251 = vshrl.u32 %v250, 7
        %v252 = vrot.slane %v249, 7
        %vm253 = vcmask 1040384
        %v254 = vsel %vm253, %v248, %v252
        %vm255 = vcmask 1041409
        %v256 = vsel %vm255, %v248, %v252
        %v257 = vrot.slane %v256, 1
        %vm258 = vcmask 1042434
        %v259 = vsel %vm258, %v248, %v252
        %v260 = vrot.slane %v259, 2
        %vm261 = vcmask 1043459
        %v262 = vsel %vm261, %v248, %v252
        %v263 = vrot.slane %v262, 3
        %vm264 = vcmask 1044484
        %v265 = vsel %vm264, %v248, %v252
        %v266 = vrot.slane %v265, 4
        %vm267 = vcmask 1045509
        %v268 = vsel %vm267, %v248, %v252
        %v269 = vrot.slane %v268, 5
        %vm270 = vcmask 1046534
        %v271 = vsel %vm270, %v248, %v252
        %v272 = vrot.slane %v271, 6
        %vm273 = vcmask 1046528
        %v274 = vsel %vm273, %v252, %v248
        %v275 = vrot.slane %v274, 7
        %v276 = vperm.slane %v254, 0
        %v277 = vperm.slane %v254, 1
        %v278 = vperm.slane %v257, 0
        %v279 = vperm.slane %v257, 1
        %v280 = vperm.slane %v260, 0
        %v281 = vperm.slane %v260, 1
        %v282 = vperm.slane %v263, 0
        %v283 = vperm.slane %v263, 1
        %v284 = vperm.slane %v266, 0
        %v285 = vperm.slane %v266, 1
        %v286 = vperm.slane %v269, 0
        %v287 = vperm.slane %v269, 1
        %v288 = vperm.slane %v272, 0
        %v289 = vperm.slane %v272, 1
        %v290 = vperm.slane %v275, 0
        %v291 = vperm.slane %v275, 1
        %vm292 = vcmp.eq.s32.totalorder %v251, %v276
        %vm293 = vcmp.eq.s32.totalorder %v251, %v277
        %vm294 = vcmp.eq.s32.totalorder %v251, %v278
        %vm295 = vcmp.eq.s32.totalorder %v251, %v279
        %vm296 = vcmp.eq.s32.totalorder %v251, %v280
        %vm297 = vcmp.eq.s32.totalorder %v251, %v281
        %vm298 = vcmp.eq.s32.totalorder %v251, %v282
        %vm299 = vcmp.eq.s32.totalorder %v251, %v283
        %vm300 = vcmp.eq.s32.totalorder %v251, %v284
        %vm301 = vcmp.eq.s32.totalorder %v251, %v285
        %vm302 = vcmp.eq.s32.totalorder %v251, %v286
        %vm303 = vcmp.eq.s32.totalorder %v251, %v287
        %vm304 = vcmp.eq.s32.totalorder %v251, %v288
        %vm305 = vcmp.eq.s32.totalorder %v251, %v289
        %vm306 = vcmp.eq.s32.totalorder %v251, %v290
        %vm307 = vcmp.eq.s32.totalorder %v251, %v291
        %v308 = vsel %vm292, %v232, 0.0
        %v309 = vsel %vm293, %v233, 0.0
        %v310 = vsel %vm294, %v234, 0.0
        %v311 = vsel %vm295, %v235, 0.0
        %v312 = vsel %vm296, %v236, 0.0
        %v313 = vsel %vm297, %v237, 0.0
        %v314 = vsel %vm298, %v238, 0.0
        %v315 = vsel %vm299, %v239, 0.0
        %v316 = vsel %vm300, %v240, 0.0
        %v317 = vsel %vm301, %v241, 0.0
        %v318 = vsel %vm302, %v242, 0.0
        %v319 = vsel %vm303, %v243, 0.0
        %v320 = vsel %vm304, %v244, 0.0
        %v321 = vsel %vm305, %v245, 0.0
        %v322 = vsel %vm306, %v246, 0.0
        %v323 = vsel %vm307, %v247, 0.0
        %v324 = vrot.slane %v308, 4
        %v325 = vadd.f32 %v308, %v324
        %v326 = vrot.slane %v325, 2
        %v327 = vadd.f32 %v325, %v326
        %v328 = vrot.slane %v327, 1
        %v329 = vadd.f32 %v327, %v328
        %v330 = vrot.slane %v309, 4
        %v331 = vadd.f32 %v309, %v330
        %v332 = vrot.slane %v331, 2
        %v333 = vadd.f32 %v331, %v332
        %v334 = vrot.slane %v333, 1
        %v335 = vadd.f32 %v333, %v334
        %v336 = vrot.slane %v310, 4
        %v337 = vadd.f32 %v310, %v336
        %v338 = vrot.slane %v337, 2
        %v339 = vadd.f32 %v337, %v338
        %v340 = vrot.slane %v339, 1
        %v341 = vadd.f32 %v339, %v340
        %v342 = vrot.slane %v311, 4
        %v343 = vadd.f32 %v311, %v342
        %v344 = vrot.slane %v343, 2
        %v345 = vadd.f32 %v343, %v344
        %v346 = vrot.slane %v345, 1
        %v347 = vadd.f32 %v345, %v346
        %v348 = vrot.slane %v312, 4
        %v349 = vadd.f32 %v312, %v348
        %v350 = vrot.slane %v349, 2
        %v351 = vadd.f32 %v349, %v350
        %v352 = vrot.slane %v351, 1
        %v353 = vadd.f32 %v351, %v352
        %v354 = vrot.slane %v313, 4
        %v355 = vadd.f32 %v313, %v354
        %v356 = vrot.slane %v355, 2
        %v357 = vadd.f32 %v355, %v356
        %v358 = vrot.slane %v357, 1
        %v359 = vadd.f32 %v357, %v358
        %v360 = vrot.slane %v314, 4
        %v361 = vadd.f32 %v314, %v360
        %v362 = vrot.slane %v361, 2
        %v363 = vadd.f32 %v361, %v362
        %v364 = vrot.slane %v363, 1
        %v365 = vadd.f32 %v363, %v364
        %v366 = vrot.slane %v315, 4
        %v367 = vadd.f32 %v315, %v366
        %v368 = vrot.slane %v367, 2
        %v369 = vadd.f32 %v367, %v368
        %v370 = vrot.slane %v369, 1
        %v371 = vadd.f32 %v369, %v370
        %v372 = vrot.slane %v316, 4
        %v373 = vadd.f32 %v316, %v372
        %v374 = vrot.slane %v373, 2
        %v375 = vadd.f32 %v373, %v374
        %v376 = vrot.slane %v375, 1
        %v377 = vadd.f32 %v375, %v376
        %v378 = vrot.slane %v317, 4
        %v379 = vadd.f32 %v317, %v378
        %v380 = vrot.slane %v379, 2
        %v381 = vadd.f32 %v379, %v380
        %v382 = vrot.slane %v381, 1
        %v383 = vadd.f32 %v381, %v382
        %v384 = vrot.slane %v318, 4
        %v385 = vadd.f32 %v318, %v384
        %v386 = vrot.slane %v385, 2
        %v387 = vadd.f32 %v385, %v386
        %v388 = vrot.slane %v387, 1
        %v389 = vadd.f32 %v387, %v388
        %v390 = vrot.slane %v319, 4
        %v391 = vadd.f32 %v319, %v390
        %v392 = vrot.slane %v391, 2
        %v393 = vadd.f32 %v391, %v392
        %v394 = vrot.slane %v393, 1
        %v395 = vadd.f32 %v393, %v394
        %v396 = vrot.slane %v320, 4
        %v397 = vadd.f32 %v320, %v396
        %v398 = vrot.slane %v397, 2
        %v399 = vadd.f32 %v397, %v398
        %v400 = vrot.slane %v399, 1
        %v401 = vadd.f32 %v399, %v400
        %v402 = vrot.slane %v321, 4
        %v403 = vadd.f32 %v321, %v402
        %v404 = vrot.slane %v403, 2
        %v405 = vadd.f32 %v403, %v404
        %v406 = vrot.slane %v405, 1
        %v407 = vadd.f32 %v405, %v406
        %v408 = vrot.slane %v322, 4
        %v409 = vadd.f32 %v322, %v408
        %v410 = vrot.slane %v409, 2
        %v411 = vadd.f32 %v409, %v410
        %v412 = vrot.slane %v411, 1
        %v413 = vadd.f32 %v411, %v412
        %v414 = vrot.slane %v323, 4
        %v415 = vadd.f32 %v323, %v414
        %v416 = vrot.slane %v415, 2
        %v417 = vadd.f32 %v415, %v416
        %v418 = vrot.slane %v417, 1
        %v419 = vadd.f32 %v417, %v418
        %v420 = vmul.f32 %v329, 1.442695
        %v421 = vpow.pop %v420
        %v422 = vmul.f32 %v335, 1.442695
        %v423 = vpow.pop %v422
        %v424 = vmul.f32 %v341, 1.442695
        %v425 = vpow.pop %v424
        %v426 = vmul.f32 %v347, 1.442695
        %v427 = vpow.pop %v426
        %v428 = vmul.f32 %v353, 1.442695
        %v429 = vpow.pop %v428
        %v430 = vmul.f32 %v359, 1.442695
        %v431 = vpow.pop %v430
        %v432 = vmul.f32 %v365, 1.442695
        %v433 = vpow.pop %v432
        %v434 = vmul.f32 %v371, 1.442695
        %v435 = vpow.pop %v434
        %v436 = vmul.f32 %v377, 1.442695
        %v437 = vpow.pop %v436
        %v438 = vmul.f32 %v383, 1.442695
        %v439 = vpow.pop %v438
        %v440 = vmul.f32 %v389, 1.442695
        %v441 = vpow.pop %v440
        %v442 = vmul.f32 %v395, 1.442695
        %v443 = vpow.pop %v442
        %v444 = vmul.f32 %v401, 1.442695
        %v445 = vpow.pop %v444
        %v446 = vmul.f32 %v407, 1.442695
        %v447 = vpow.pop %v446
        %v448 = vmul.f32 %v413, 1.442695
        %v449 = vpow.pop %v448
        %v450 = vmul.f32 %v419, 1.442695
        %v451 = vpow.pop %v450
        %v452 = vld [vmem:[#allocation2] sm:$0xff]
        %v453 = vld [vmem:[#allocation2 + $0x8] sm:$0xff]
        %v454 = vsub.f32 1.0, %v421
        %v455 = vsub.f32 1.0, %v423
        %v456 = vsub.f32 1.0, %v425
        %v457 = vsub.f32 1.0, %v427
        %v458 = vsub.f32 1.0, %v429
        %v459 = vsub.f32 1.0, %v431
        %v460 = vsub.f32 1.0, %v433
        %v461 = vsub.f32 1.0, %v435
        %v462 = vsub.f32 1.0, %v437
        %v463 = vsub.f32 1.0, %v439
        %v464 = vsub.f32 1.0, %v441
        %v465 = vsub.f32 1.0, %v443
        %v466 = vsub.f32 1.0, %v445
        %v467 = vsub.f32 1.0, %v447
        %v468 = vsub.f32 1.0, %v449
        %v469 = vsub.f32 1.0, %v451
        %v470 = vmul.f32 %v454, %v454
        %v471 = vmul.f32 %v455, %v455
        %v472 = vmul.f32 %v456, %v456
        %v473 = vmul.f32 %v457, %v457
        %v474 = vmul.f32 %v458, %v458
        %v475 = vmul.f32 %v459, %v459
        %v476 = vmul.f32 %v460, %v460
        %v477 = vmul.f32 %v461, %v461
        %v478 = vmul.f32 %v462, %v462
        %v479 = vmul.f32 %v463, %v463
        %v480 = vmul.f32 %v464, %v464
        %v481 = vmul.f32 %v465, %v465
        %v482 = vmul.f32 %v466, %v466
        %v483 = vmul.f32 %v467, %v467
        %v484 = vmul.f32 %v468, %v468
        %v485 = vmul.f32 %v469, %v469
        %v486 = vmul.f32 %v470, %v470
        %v487 = vmul.f32 %v471, %v471
        %v488 = vmul.f32 %v472, %v472
        %v489 = vmul.f32 %v473, %v473
        %v490 = vmul.f32 %v474, %v474
        %v491 = vmul.f32 %v475, %v475
        %v492 = vmul.f32 %v476, %v476
        %v493 = vmul.f32 %v477, %v477
        %v494 = vmul.f32 %v478, %v478
        %v495 = vmul.f32 %v479, %v479
        %v496 = vmul.f32 %v480, %v480
        %v497 = vmul.f32 %v481, %v481
        %v498 = vmul.f32 %v482, %v482
        %v499 = vmul.f32 %v483, %v483
        %v500 = vmul.f32 %v484, %v484
        %v501 = vmul.f32 %v485, %v485
        %v502 = vmul.f32 %v470, %v486
        %v503 = vmul.f32 %v471, %v487
        %v504 = vmul.f32 %v472, %v488
        %v505 = vmul.f32 %v473, %v489
        %v506 = vmul.f32 %v474, %v490
        %v507 = vmul.f32 %v475, %v491
        %v508 = vmul.f32 %v476, %v492
        %v509 = vmul.f32 %v477, %v493
        %v510 = vmul.f32 %v478, %v494
        %v511 = vmul.f32 %v479, %v495
        %v512 = vmul.f32 %v480, %v496
        %v513 = vmul.f32 %v481, %v497
        %v514 = vmul.f32 %v482, %v498
        %v515 = vmul.f32 %v483, %v499
        %v516 = vmul.f32 %v484, %v500
        %v517 = vmul.f32 %v485, %v501
        %v518 = vsub.f32 0.0, %v502
        %v519 = vsub.f32 0.0, %v503
        %v520 = vsub.f32 0.0, %v504
        %v521 = vsub.f32 0.0, %v505
        %v522 = vsub.f32 0.0, %v506
        %v523 = vsub.f32 0.0, %v507
        %v524 = vsub.f32 0.0, %v508
        %v525 = vsub.f32 0.0, %v509
        %v526 = vsub.f32 0.0, %v510
        %v527 = vsub.f32 0.0, %v511
        %v528 = vsub.f32 0.0, %v512
        %v529 = vsub.f32 0.0, %v513
        %v530 = vsub.f32 0.0, %v514
        %v531 = vsub.f32 0.0, %v515
        %v532 = vsub.f32 0.0, %v516
        %v533 = vsub.f32 0.0, %v517
        %v534 = vmul.f32 %v518, %v329
        %v535 = vmul.f32 %v519, %v335
        %v536 = vmul.f32 %v520, %v341
        %v537 = vmul.f32 %v521, %v347
        %v538 = vmul.f32 %v522, %v353
        %v539 = vmul.f32 %v523, %v359
        %v540 = vmul.f32 %v524, %v365
        %v541 = vmul.f32 %v525, %v371
        %v542 = vmul.f32 %v526, %v377
        %v543 = vmul.f32 %v527, %v383
        %v544 = vmul.f32 %v528, %v389
        %v545 = vmul.f32 %v529, %v395
        %v546 = vmul.f32 %v530, %v401
        %v547 = vmul.f32 %v531, %v407
        %v548 = vmul.f32 %v532, %v413
        %v549 = vmul.f32 %v533, %v419
        %v566 = vsel %vm255, %v536, %v534
        %v567 = vsel %vm258, %v538, %v566
        %v568 = vsel %vm261, %v540, %v567
        %v569 = vsel %vm264, %v542, %v568
        %v570 = vsel %vm267, %v544, %v569
        %v571 = vsel %vm270, %v546, %v570
        %vm572 = vcmask 1047559
        %v573 = vsel %vm572, %v548, %v571
        %v574 = vsel %vm255, %v537, %v535
        %v575 = vsel %vm258, %v539, %v574
        %v576 = vsel %vm261, %v541, %v575
        %v577 = vsel %vm264, %v543, %v576
        %v578 = vsel %vm267, %v545, %v577
        %v579 = vsel %vm270, %v547, %v578
        %v580 = vsel %vm572, %v549, %v579
        %v583 = vadd.f32 %v452, %v573
        %v584 = vadd.f32 %v453, %v580
        %585 = vst [vmem:[#allocation2] sm:$0xff] %v583
        %586 = vst [vmem:[#allocation2 + $0x8] sm:$0xff] %v584
        // Predicated region
        $region41: #{tpu_custom_call.1} parent=27 // pred_check
          %p587 = pneg %p226
        $region42: #{tpu_custom_call.1} parent=27 // pred_check_branch
          %589 = sbr.rel (%p587) target = $region44
        $region43: #{tpu_custom_call.1} parent=27 // pred_region
          %v590 = vld [vmem:[#allocation2] sm:$0xff]
          %v591 = vld [vmem:[#allocation2 + $0x8] sm:$0xff]
          %v592 = vadd.f32 %v590, %v591
          %593 = vadd.xlane.f32.xlu0 %v592
          %v594 = vpop.xlane.xlu0 %593
          %v595 = vrot.slane %v594, 4
          %v596 = vadd.f32 %v594, %v595
          %v597 = vrot.slane %v596, 2
          %v598 = vadd.f32 %v596, %v597
          %v599 = vrot.slane %v598, 1
          %v600 = vadd.f32 %v598, %v599
          %vm601 = vcmask 0
          %602 = vst.msk [vmem:[%s225] sm:$0x1] %vm601, %v600
        $region44: #{tpu_custom_call.1} parent=27 // pred_fallthru
          _
        %p603 = scmp.lt.s32.totalorder %s23, 1
        %s604 = scalar_select %p603, %s23, 1
        %s605 = scalar_lea.vmem %s2, %s604
        // Predicated region
        $region45: #{tpu_custom_call.1} parent=27 // pred_check
          %p606 = pneg %p105
        $region46: #{tpu_custom_call.1} parent=27 // pred_check_branch
          %608 = sbr.rel (%p606) target = $region48
        $region47: #{tpu_custom_call.1} parent=27 // pred_region
          _
        $region48: #{tpu_custom_call.1} parent=27 // pred_fallthru
          _
      $region28: #{tpu_custom_call.1} parent=5 // pred_fallthru
        _
      %p609 = scmp.le.s32.totalorder 2, %s14
      // Predicated region
      $region49: #{tpu_custom_call.1} parent=5 // pred_check
        %p610 = pneg %p609
      $region50: #{tpu_custom_call.1} parent=5 // pred_check_branch
        %612 = sbr.rel (%p610) target = $region52
      $region51: #{tpu_custom_call.1} parent=5 // pred_region
        %s613 = ssub.s32 %s14, 2
        // Predicated region
        $region53: #{tpu_custom_call.1} parent=51 // pred_check
          %p614 = pneg %p111
        $region54: #{tpu_custom_call.1} parent=51 // pred_check_branch
          %616 = sbr.rel (%p614) target = $region56
        $region55: #{tpu_custom_call.1} parent=51 // pred_region
          %p617 = scmp.lt.s32.totalorder %s25, 1
          %s618 = scalar_select %p617, %s25, 1
          %s619 = scalar_lea.vmem %s2, %s618
        $region56: #{tpu_custom_call.1} parent=51 // pred_fallthru
          _
      $region52: #{tpu_custom_call.1} parent=5 // pred_fallthru
        _
    $region6: #{tpu_custom_call.1} parent=1 // loop_footer
      %s18 = sadd.s32 1, %s14
    $region7: #{tpu_custom_call.1} parent=1 // loop_footer_branch
      %13 = sbr.rel target = $region3
    $region8: #{tpu_custom_call.1} parent=1 // loop_exit
      _
    %620 = vsyncpa [#allocation4], 1
    %s621 = scalar_lea.sflag [#allocation4], 1
    %622 = vsyncpa %s621, 1
    %623 = vsyncpa [#allocation6], 1
    %s624 = scalar_lea.sflag [#allocation6], 1
    %625 = vsyncpa %s624, 1

</llo_original>
